<compile_context>
chip_gen: v5e
topology: v5e:2x2
jax: 0.10.0
libtpu: 0.0.40
codegen_flags: <defaults>
</compile_context>

<pallas_src>
import functools

import jax
import jax.numpy as jnp
from jax.experimental import pallas as pl
from jax.experimental.pallas import tpu as pltpu

IN_FEATS = 2 * 7 * 7      # 98
H1 = 49
H2 = 25
N_ACTIONS = 5
OUT_PAD = 8               # output lanes padded 5 -> 8 (block last dim == array last dim)
TB_MAX = 4096             # batch tile (multiple of 8); safe for v5e's 16 MiB scoped VMEM


def _round_up(x, m):
    return (x + m - 1) // m * m


def _net_kernel(x_ref, wc_ref, bc_ref, w1_ref, b1_ref, w2_ref, b2_ref, out_ref):
    # x_ref : (TB, 98)  f32   flattened NCHW input (conv == full-window dot product)
    # wc_ref: (98, 49)  bf16  conv weight reshaped + transposed
    # w1_ref: (49, 25)  bf16  f1 weight transposed
    # w2_ref: (25, 8)   bf16  f2 weight transposed, zero-padded to 8 output lanes
    # biases: f32, shapes (1, 49), (1, 25), (1, 8)
    # out_ref: (TB, 8)  f32   logits in lanes 0..4
    x = x_ref[...].astype(jnp.bfloat16)          # bf16 cast in-kernel (no HBM pass)

    # conv (as matmul) + bias + relu -- accumulate in f32, elementwise in f32
    h = jnp.dot(x, wc_ref[...], preferred_element_type=jnp.float32)
    h = jnp.maximum(h + bc_ref[...], 0.0)

    # f1 + relu
    h = jnp.dot(h.astype(jnp.bfloat16), w1_ref[...], preferred_element_type=jnp.float32)
    h = jnp.maximum(h + b1_ref[...], 0.0)

    # f2 (action logits), narrow 8-lane output slab
    out = jnp.dot(h.astype(jnp.bfloat16), w2_ref[...], preferred_element_type=jnp.float32)
    out_ref[...] = out + b2_ref[...]


def prepare_params(params):
    """One-time preprocessing of the PyTorch-shaped parameters.

    Transposes / reshapes weights to (in, out), pads the final layer to 8 output
    lanes, and casts matmul weights to bf16.  Call once; reuse every step.
    """
    wc_t = params["conv_w"].reshape(H1, IN_FEATS).T.astype(jnp.bfloat16)    # (98, 49)
    w1_t = params["f1_w"].T.astype(jnp.bfloat16)                             # (49, 25)
    w2_t = params["f2_w"].T.astype(jnp.float32)                              # (25, 5)
    w2_pad = jnp.zeros((H2, OUT_PAD), jnp.float32).at[:, :N_ACTIONS].set(w2_t)
    w2_pad = w2_pad.astype(jnp.bfloat16)                                     # (25, 8)

    bc_r = params["conv_b"].reshape(1, H1).astype(jnp.float32)               # (1, 49)
    b1_r = params["f1_b"].reshape(1, H2).astype(jnp.float32)                 # (1, 25)
    b2_pad = jnp.zeros((1, OUT_PAD), jnp.float32).at[0, :N_ACTIONS].set(
        params["f2_b"].astype(jnp.float32))                                  # (1, 8)

    return dict(wc=wc_t, bc=bc_r, w1=w1_t, b1=b1_r, w2=w2_pad, b2=b2_pad)


@jax.jit
def net_forward(x_nchw, prepped):
    """x_nchw: (B, 2, 7, 7) float32. Returns (B, 5) action values (float32)."""
    B = x_nchw.shape[0]
    assert x_nchw.shape[1:] == (2, 7, 7), "Net requires (B, 2, 7, 7) input"

    # Flatten NCHW receptive field -> (B, 98). Row-major contiguous: metadata-only,
    # no HBM copy. Stays f32; the bf16 cast happens in-kernel.
    x_flat = x_nchw.reshape(B, IN_FEATS)

    # Batch tiling: TB rows per grid step, ragged last block (no jnp.pad pass).
    # Cap at ceil(B/2) (rounded to 8) so large-B grids keep >= 2 steps and shard
    # across v7x's two TensorCores; small B just gets a single 8-row tile.
    half = _round_up(pl.cdiv(B, 2), 8)
    TB = max(8, min(TB_MAX, half))
    grid = (pl.cdiv(B, TB),)

    # Weights/biases: same block index every grid step -> stay VMEM-resident.
    const_spec = lambda shape: pl.BlockSpec(shape, lambda i: (0, 0))

    flops_per_row = 2 * (IN_FEATS * H1 + H1 * H2 + H2 * N_ACTIONS)
    bytes_accessed = (
        B * IN_FEATS * 4              # f32 x stream in
        + B * OUT_PAD * 4             # f32 narrow logits out
        + (IN_FEATS * H1 + H1 * H2 + H2 * OUT_PAD) * 2   # bf16 weights
        + (H1 + H2 + OUT_PAD) * 4     # f32 biases
    )
    cost = pl.CostEstimate(
        flops=B * flops_per_row,
        transcendentals=0,
        bytes_accessed=bytes_accessed,
    )

    out_pad = pl.pallas_call(
        _net_kernel,
        out_shape=jax.ShapeDtypeStruct((B, OUT_PAD), jnp.float32),
        grid=grid,
        in_specs=[
            pl.BlockSpec((TB, IN_FEATS), lambda i: (i, 0)),   # x: streamed per tile
            const_spec((IN_FEATS, H1)),                       # conv weight
            const_spec((1, H1)),                              # conv bias
            const_spec((H1, H2)),                             # f1 weight
            const_spec((1, H2)),                              # f1 bias
            const_spec((H2, OUT_PAD)),                        # f2 weight (padded)
            const_spec((1, OUT_PAD)),                         # f2 bias (padded)
        ],
        out_specs=pl.BlockSpec((TB, OUT_PAD), lambda i: (i, 0)),
        compiler_params=pltpu.CompilerParams(
            dimension_semantics=("parallel",),
        ),
        cost_estimate=cost,
    )(
        x_flat,
        prepped["wc"], prepped["bc"],
        prepped["w1"], prepped["b1"],
        prepped["w2"], prepped["b2"],
    )

    # Strip the lane padding (logits live in lanes 0..4).
    return out_pad[:, :N_ACTIONS]


def init_params(key):
    """Deterministic synthetic parameters matching the PyTorch module's shapes."""
    ks = jax.random.split(key, 6)
    conv_w = 0.1 * jax.random.normal(ks[0], (H1, 2, 7, 7), jnp.float32)
    conv_b = 0.1 * jax.random.normal(ks[1], (H1,), jnp.float32)
    f1_w = 0.1 * jax.random.normal(ks[2], (H2, H1), jnp.float32)
    f1_b = 0.1 * jax.random.normal(ks[3], (H2,), jnp.float32)
    f2_w = 0.1 * jax.random.normal(ks[4], (N_ACTIONS, H2), jnp.float32)
    f2_b = 0.1 * jax.random.normal(ks[5], (N_ACTIONS,), jnp.float32)
    return dict(conv_w=conv_w, conv_b=conv_b, f1_w=f1_w, f1_b=f1_b,
                f2_w=f2_w, f2_b=f2_b)


def _reference_forward(x_nchw, params):
    """Pure-JAX f32 reference (same math, no Pallas)."""
    B = x_nchw.shape[0]
    x = x_nchw.reshape(B, -1)
    h = jnp.maximum(x @ params["conv_w"].reshape(H1, -1).T + params["conv_b"], 0.0)
    h = jnp.maximum(h @ params["f1_w"].T + params["f1_b"], 0.0)
    return h @ params["f2_w"].T + params["f2_b"]


if __name__ == "__main__":
    key = jax.random.PRNGKey(0)
    k_params, k_x = jax.random.split(key)

    params = init_params(k_params)
    prepped = prepare_params(params)

    # Small deterministic input consistent with the module: (B=2, C=2, H=7, W=7)
    x = jax.random.normal(k_x, (2, 2, 7, 7), jnp.float32)

    out = net_forward(x, prepped)
    out = jax.block_until_ready(out)

    ref = _reference_forward(x, params)
    assert out.shape == (2, N_ACTIONS)
    # bf16 matmul weights/activations -> loose tolerance vs. the f32 reference.
    assert jnp.allclose(out, ref, atol=5e-2, rtol=5e-2), (out, ref)

    print("KERNEL_OK")
</pallas_src>

<mosaic_0001>
module attributes {stable_mosaic.version = 11 : i64} {
  func.func @_net_kernel(%arg0: i32, %arg1: memref<8x98xf32, #tpu.memory_space<vmem>>, %arg2: memref<98x49xbf16, #tpu.memory_space<vmem>>, %arg3: memref<1x49xf32, #tpu.memory_space<vmem>>, %arg4: memref<49x25xbf16, #tpu.memory_space<vmem>>, %arg5: memref<1x25xf32, #tpu.memory_space<vmem>>, %arg6: memref<25x8xbf16, #tpu.memory_space<vmem>>, %arg7: memref<1x8xf32, #tpu.memory_space<vmem>>, %arg8: memref<8x8xf32, #tpu.memory_space<vmem>>) attributes {dimension_semantics = [#tpu.dimension_semantics<parallel>], iteration_bounds = array<i64: 1>, scalar_prefetch = 0 : i64, scratch_operands = 0 : i64, tpu.core_type = #tpu.core_type<tc>, window_params = [{transform_indices = @transform_0, window_bounds = array<i64: 8, 98>}, {pipeline_mode = #tpu.pipeline_mode<synchronous>, transform_indices = @transform_1, window_bounds = array<i64: 98, 49>}, {pipeline_mode = #tpu.pipeline_mode<synchronous>, transform_indices = @transform_2, window_bounds = array<i64: 1, 49>}, {pipeline_mode = #tpu.pipeline_mode<synchronous>, transform_indices = @transform_3, window_bounds = array<i64: 49, 25>}, {pipeline_mode = #tpu.pipeline_mode<synchronous>, transform_indices = @transform_4, window_bounds = array<i64: 1, 25>}, {pipeline_mode = #tpu.pipeline_mode<synchronous>, transform_indices = @transform_5, window_bounds = array<i64: 25, 8>}, {pipeline_mode = #tpu.pipeline_mode<synchronous>, transform_indices = @transform_6, window_bounds = array<i64: 1, 8>}, {transform_indices = @transform_7, window_bounds = array<i64: 8, 8>}]} {
    %c0 = arith.constant 0 : index
    %c0_0 = arith.constant 0 : index
    %0 = vector.load %arg1[%c0, %c0_0] : memref<8x98xf32, #tpu.memory_space<vmem>>, vector<8x98xf32>
    %1 = arith.truncf %0 : vector<8x98xf32> to vector<8x98xbf16>
    %c0_1 = arith.constant 0 : index
    %c0_2 = arith.constant 0 : index
    %2 = vector.load %arg2[%c0_1, %c0_2] : memref<98x49xbf16, #tpu.memory_space<vmem>>, vector<98x49xbf16>
    %cst = arith.constant dense<0.000000e+00> : vector<8x49xf32>
    %3 = tpu.matmul %1, %2, %cst {dimension_numbers = #tpu.dot_dimension_numbers<[1], [0], [0], [1], [0, 0, 1, 1], [], []>} : vector<8x98xbf16>, vector<98x49xbf16>, vector<8x49xf32> -> vector<8x49xf32>
    %c0_3 = arith.constant 0 : index
    %c0_4 = arith.constant 0 : index
    %4 = vector.load %arg3[%c0_3, %c0_4] : memref<1x49xf32, #tpu.memory_space<vmem>>, vector<1x49xf32>
    %5 = vector.broadcast %4 : vector<1x49xf32> to vector<8x49xf32>
    %6 = arith.addf %3, %5 : vector<8x49xf32>
    %cst_5 = arith.constant 0.000000e+00 : f32
    %7 = vector.broadcast %cst_5 : f32 to vector<8x49xf32>
    %8 = arith.maximumf %6, %7 : vector<8x49xf32>
    %9 = arith.truncf %8 : vector<8x49xf32> to vector<8x49xbf16>
    %c0_6 = arith.constant 0 : index
    %c0_7 = arith.constant 0 : index
    %10 = vector.load %arg4[%c0_6, %c0_7] : memref<49x25xbf16, #tpu.memory_space<vmem>>, vector<49x25xbf16>
    %cst_8 = arith.constant dense<0.000000e+00> : vector<8x25xf32>
    %11 = tpu.matmul %9, %10, %cst_8 {dimension_numbers = #tpu.dot_dimension_numbers<[1], [0], [0], [1], [0, 0, 1, 1], [], []>} : vector<8x49xbf16>, vector<49x25xbf16>, vector<8x25xf32> -> vector<8x25xf32>
    %c0_9 = arith.constant 0 : index
    %c0_10 = arith.constant 0 : index
    %12 = vector.load %arg5[%c0_9, %c0_10] : memref<1x25xf32, #tpu.memory_space<vmem>>, vector<1x25xf32>
    %13 = vector.broadcast %12 : vector<1x25xf32> to vector<8x25xf32>
    %14 = arith.addf %11, %13 : vector<8x25xf32>
    %cst_11 = arith.constant 0.000000e+00 : f32
    %15 = vector.broadcast %cst_11 : f32 to vector<8x25xf32>
    %16 = arith.maximumf %14, %15 : vector<8x25xf32>
    %17 = arith.truncf %16 : vector<8x25xf32> to vector<8x25xbf16>
    %c0_12 = arith.constant 0 : index
    %c0_13 = arith.constant 0 : index
    %18 = vector.load %arg6[%c0_12, %c0_13] : memref<25x8xbf16, #tpu.memory_space<vmem>>, vector<25x8xbf16>
    %cst_14 = arith.constant dense<0.000000e+00> : vector<8x8xf32>
    %19 = tpu.matmul %17, %18, %cst_14 {dimension_numbers = #tpu.dot_dimension_numbers<[1], [0], [0], [1], [0, 0, 1, 1], [], []>} : vector<8x25xbf16>, vector<25x8xbf16>, vector<8x8xf32> -> vector<8x8xf32>
    %c0_15 = arith.constant 0 : index
    %c0_16 = arith.constant 0 : index
    %20 = vector.load %arg7[%c0_15, %c0_16] : memref<1x8xf32, #tpu.memory_space<vmem>>, vector<1x8xf32>
    %21 = vector.broadcast %20 : vector<1x8xf32> to vector<8x8xf32>
    %22 = arith.addf %19, %21 : vector<8x8xf32>
    %c0_17 = arith.constant 0 : index
    %c0_18 = arith.constant 0 : index
    %23 = vector.load %arg8[%c0_17, %c0_18] : memref<8x8xf32, #tpu.memory_space<vmem>>, vector<8x8xf32>
    tpu.vector_store %arg8[%c0_17, %c0_18], %22 {strides = array<i32>} : memref<8x8xf32, #tpu.memory_space<vmem>>, vector<8x8xf32>,
    return
  }
  func.func @transform_0(%arg0: i32) -> (i32, i32) {
    %c0_i32 = arith.constant 0 : i32
    %c0_i32_0 = arith.constant 0 : i32
    return %arg0, %c0_i32 : i32, i32
  }
  func.func @transform_1(%arg0: i32) -> (i32, i32) {
    %c0_i32 = arith.constant 0 : i32
    %c0_i32_0 = arith.constant 0 : i32
    %c0_i32_1 = arith.constant 0 : i32
    return %c0_i32, %c0_i32_0 : i32, i32
  }
  func.func @transform_2(%arg0: i32) -> (i32, i32) {
    %c0_i32 = arith.constant 0 : i32
    %c0_i32_0 = arith.constant 0 : i32
    %c0_i32_1 = arith.constant 0 : i32
    return %c0_i32, %c0_i32_0 : i32, i32
  }
  func.func @transform_3(%arg0: i32) -> (i32, i32) {
    %c0_i32 = arith.constant 0 : i32
    %c0_i32_0 = arith.constant 0 : i32
    %c0_i32_1 = arith.constant 0 : i32
    return %c0_i32, %c0_i32_0 : i32, i32
  }
  func.func @transform_4(%arg0: i32) -> (i32, i32) {
    %c0_i32 = arith.constant 0 : i32
    %c0_i32_0 = arith.constant 0 : i32
    %c0_i32_1 = arith.constant 0 : i32
    return %c0_i32, %c0_i32_0 : i32, i32
  }
  func.func @transform_5(%arg0: i32) -> (i32, i32) {
    %c0_i32 = arith.constant 0 : i32
    %c0_i32_0 = arith.constant 0 : i32
    %c0_i32_1 = arith.constant 0 : i32
    return %c0_i32, %c0_i32_0 : i32, i32
  }
  func.func @transform_6(%arg0: i32) -> (i32, i32) {
    %c0_i32 = arith.constant 0 : i32
    %c0_i32_0 = arith.constant 0 : i32
    %c0_i32_1 = arith.constant 0 : i32
    return %c0_i32, %c0_i32_0 : i32, i32
  }
  func.func @transform_7(%arg0: i32) -> (i32, i32) {
    %c0_i32 = arith.constant 0 : i32
    %c0_i32_0 = arith.constant 0 : i32
    return %arg0, %c0_i32 : i32, i32
  }
}

</mosaic_0001>

<llo_original>
// kernel: net_forward.1
$region0: #{net_forward.1}
  #allocation0 [shape = 'u32[]', space=smem, size = 0x4, offset = 0x4, fixed_abs, tag = 'smem constant byte address 0x4 - core index']
  #allocation1 [shape = 'u32[72,128]{1,0:T(1,128)}', space=vmem, size = 0x9000, scoped, tag = 'internal scratch']
  %s0 = inlined_call_operand.vmem [shape: f32[2,98], index: 0, kind: input, shape index: {}]
  %s1 = inlined_call_operand.vmem [shape: bf16[98,49], index: 1, kind: input, shape index: {}]
  %s2 = inlined_call_operand.vmem [shape: f32[1,49], index: 2, kind: input, shape index: {}]
  %s3 = inlined_call_operand.vmem [shape: bf16[49,25], index: 3, kind: input, shape index: {}]
  %s4 = inlined_call_operand.vmem [shape: f32[1,25], index: 4, kind: input, shape index: {}]
  %s5 = inlined_call_operand.vmem [shape: bf16[25,8], index: 5, kind: input, shape index: {}]
  %s6 = inlined_call_operand.vmem [shape: f32[1,8], index: 6, kind: input, shape index: {}]
  %s7 = inlined_call_operand.hbm [shape: f32[2,8], index: 7, kind: output, shape index: {}]
  %s8 = sld [smem:[#allocation0]]
  $region38: #{net_forward.1} parent=0
    _
  %s10 = ssub.s32 1, %s8
  %s11 = scalar_select 0, %s10, %s8
  $region1: #{net_forward.1} parent=0
    #allocation2 [shape = 'u8[4096]{0}', space=vmem, size = 0x1000, scoped, tag = 'output window, operand 0, single buffered']
    #allocation3 [shape = 's32[1]{0}', space=sflag, size = 0x4, scoped, tag = 'scoped memory for net_forward.1']
    %12 = vsyncpa [#allocation3], 0
    // Predicated region
    $region2: #{net_forward.1} parent=1 // pred_check
      _
    $region3: #{net_forward.1} parent=1 // pred_check_branch
      %14 = sbr.rel (0) target = $region5
    $region4: #{net_forward.1} parent=1 // pred_region
      _
    $region5: #{net_forward.1} parent=1 // pred_fallthru
      _
    // Predicated region
    $region6: #{net_forward.1} parent=1 // pred_check
      _
    $region7: #{net_forward.1} parent=1 // pred_check_branch
      %16 = sbr.rel (0) target = $region9
    $region8: #{net_forward.1} parent=1 // pred_region
      _
    $region9: #{net_forward.1} parent=1 // pred_fallthru
      _
    // Predicated region
    $region10: #{net_forward.1} parent=1 // pred_check
      _
    $region11: #{net_forward.1} parent=1 // pred_check_branch
      %18 = sbr.rel (0) target = $region13
    $region12: #{net_forward.1} parent=1 // pred_region
      _
    $region13: #{net_forward.1} parent=1 // pred_fallthru
      _
    // Predicated region
    $region14: #{net_forward.1} parent=1 // pred_check
      _
    $region15: #{net_forward.1} parent=1 // pred_check_branch
      %20 = sbr.rel (0) target = $region17
    $region16: #{net_forward.1} parent=1 // pred_region
      _
    $region17: #{net_forward.1} parent=1 // pred_fallthru
      _
    // Predicated region
    $region18: #{net_forward.1} parent=1 // pred_check
      _
    $region19: #{net_forward.1} parent=1 // pred_check_branch
      %22 = sbr.rel (0) target = $region21
    $region20: #{net_forward.1} parent=1 // pred_region
      _
    $region21: #{net_forward.1} parent=1 // pred_fallthru
      _
    // Predicated region
    $region22: #{net_forward.1} parent=1 // pred_check
      _
    $region23: #{net_forward.1} parent=1 // pred_check_branch
      %24 = sbr.rel (0) target = $region25
    $region24: #{net_forward.1} parent=1 // pred_region
      _
    $region25: #{net_forward.1} parent=1 // pred_fallthru
      _
    // Predicated region
    $region26: #{net_forward.1} parent=1 // pred_check
      _
    $region27: #{net_forward.1} parent=1 // pred_check_branch
      %26 = sbr.rel (0) target = $region29
    $region28: #{net_forward.1} parent=1 // pred_region
      _
    $region29: #{net_forward.1} parent=1 // pred_fallthru
      _
    %v28 = vld [vmem:[%s0] sm:$0xff]
    %v29 = vpack.c.bf16 %v28, %v28
    %v30 = vld [vmem:[%s1] sm:$0xf]
    %v31 = vld [vmem:[%s1 + $0x4] sm:$0xf]
    %v32 = vld [vmem:[%s1 + $0x8] sm:$0xf]
    %v33 = vld [vmem:[%s1 + $0xc] sm:$0xf]
    %v34 = vld [vmem:[%s1 + $0x10] sm:$0xf]
    %v35 = vld [vmem:[%s1 + $0x14] sm:$0xf]
    %v36 = vld [vmem:[%s1 + $0x18] sm:$0xf]
    %v37 = vld [vmem:[%s1 + $0x1c] sm:$0xf]
    %v38 = vld [vmem:[%s1 + $0x20] sm:$0xf]
    %v39 = vld [vmem:[%s1 + $0x24] sm:$0xf]
    %v40 = vld [vmem:[%s1 + $0x28] sm:$0xf]
    %v41 = vld [vmem:[%s1 + $0x2c] sm:$0xf]
    %v42 = vld [vmem:[%s1 + $0x30] sm:$0x1]
    %v43 = vld [vmem:[%s2] sm:$0x1]
    %v45 = vperm.slane %v43, 0
    %v60 = vunpack.c.l.b16 %v30
    %v61 = vunpack.c.l.b16 %v31
    %v62 = vunpack.c.l.b16 %v32
    %v63 = vunpack.c.l.b16 %v33
    %v64 = vunpack.c.l.b16 %v34
    %v65 = vunpack.c.l.b16 %v35
    %v66 = vunpack.c.l.b16 %v36
    %v67 = vunpack.c.l.b16 %v37
    %v68 = vunpack.c.l.b16 %v38
    %v69 = vunpack.c.l.b16 %v39
    %v70 = vunpack.c.l.b16 %v40
    %v71 = vunpack.c.l.b16 %v41
    %v72 = vunpack.c.l.b16 %v42
    %v73 = vpack.c.b16 %v61, %v60
    %v74 = vpack.c.b16 %v63, %v62
    %v75 = vpack.c.b16 %v65, %v64
    %v76 = vpack.c.b16 %v67, %v66
    %v77 = vpack.c.b16 %v69, %v68
    %v78 = vpack.c.b16 %v71, %v70
    %v79 = vpack.c.b16 %v72, %v72
    %vm86 = vcmask 801792
    %v88 = vsel %vm86, %v29, 0
    %vm90 = vcmask 1040384
    %v92 = vsel %vm90, %v79, 0
    %94 = vmatpush.bf16.msra.mxu0 0
    %95 = vmatpush.bf16.msra.mxu0 %v92
    %96 = vmatpush.bf16.msra.mxu0 %v78
    %97 = vmatpush.bf16.msra.mxu0 %v77
    %98 = vmatpush.bf16.msra.mxu0 %v76
    %99 = vmatpush.bf16.msra.mxu0 %v75
    %100 = vmatpush.bf16.msra.mxu0 %v74
    %101 = vmatpush.bf16.msra.mxu0 %v73
    %102 = vmatmul.bf16.gmra.mxu0 %v88
    %v103 = vpop.f32.mrf.mxu0
    %v104 = vadd.f32 %v45, %v103
    %v105 = vpop.f32.mrf.mxu0
    %106 = vdwg.mxu0
    %v107 = vmax.f32 %v104, 0.0
    %v108 = vpack.c.bf16 %v107, %v107
    %v109 = vld [vmem:[%s3] sm:$0xf]
    %v110 = vld [vmem:[%s3 + $0x4] sm:$0xf]
    %v111 = vld [vmem:[%s3 + $0x8] sm:$0xf]
    %v112 = vld [vmem:[%s3 + $0xc] sm:$0xf]
    %v113 = vld [vmem:[%s3 + $0x10] sm:$0xf]
    %v114 = vld [vmem:[%s3 + $0x14] sm:$0xf]
    %v115 = vld [vmem:[%s3 + $0x18] sm:$0x1]
    %v116 = vld [vmem:[%s4] sm:$0x1]
    %v118 = vperm.slane %v116, 0
    %v127 = vunpack.c.l.b16 %v109
    %v128 = vunpack.c.l.b16 %v110
    %v129 = vunpack.c.l.b16 %v111
    %v130 = vunpack.c.l.b16 %v112
    %v131 = vunpack.c.l.b16 %v113
    %v132 = vunpack.c.l.b16 %v114
    %v133 = vunpack.c.l.b16 %v115
    %v134 = vpack.c.b16 %v128, %v127
    %v135 = vpack.c.b16 %v130, %v129
    %v136 = vpack.c.b16 %v132, %v131
    %v137 = vpack.c.b16 %v133, %v133
    %vm141 = vcmask 400384
    %v143 = vsel %vm141, %v108, 0
    %v145 = vsel 0, 4294967295, 65535
    %v146 = vsel %vm90, %v145, 0
    %v148 = vand.u32 %v137, %v146
    %150 = vmatpush.bf16.msra.mxu0 0
    %151 = vmatpush.bf16.msra.mxu0 0
    %152 = vmatpush.bf16.msra.mxu0 0
    %153 = vmatpush.bf16.msra.mxu0 0
    %154 = vmatpush.bf16.msra.mxu0 %v148
    %155 = vmatpush.bf16.msra.mxu0 %v136
    %156 = vmatpush.bf16.msra.mxu0 %v135
    %157 = vmatpush.bf16.msra.mxu0 %v134
    %158 = vmatmul.bf16.gmra.mxu0 %v143
    %v159 = vpop.f32.mrf.mxu0
    %v160 = vadd.f32 %v118, %v159
    %v161 = vpop.f32.mrf.mxu0
    %162 = vdwg.mxu0
    %v163 = vmax.f32 %v160, 0.0
    %v164 = vpack.c.bf16 %v163, %v163
    %v165 = vld [vmem:[%s5] sm:$0xf]
    %v166 = vld [vmem:[%s5 + $0x4] sm:$0xf]
    %v167 = vld [vmem:[%s5 + $0x8] sm:$0xf]
    %v168 = vld [vmem:[%s5 + $0xc] sm:$0x1]
    %v169 = vld [vmem:[%s6] sm:$0x1]
    %v171 = vperm.slane %v169, 0
    %v177 = vunpack.c.l.b16 %v165
    %v178 = vunpack.c.l.b16 %v166
    %v179 = vunpack.c.l.b16 %v167
    %v180 = vunpack.c.l.b16 %v168
    %v181 = vpack.c.b16 %v178, %v177
    %v182 = vpack.c.b16 %v180, %v179
    %vm184 = vcmask 203776
    %v186 = vsel %vm184, %v164, 0
    %vm188 = vcmask 1043456
    %vm189 = vcmask 1044480
    %v190 = vsel %vm188, 4294967295, 65535
    %v191 = vsel %vm189, %v190, 0
    %v193 = vand.u32 %v182, %v191
    %195 = vmatpush.bf16.msra.mxu0 0
    %196 = vmatpush.bf16.msra.mxu0 0
    %197 = vmatpush.bf16.msra.mxu0 0
    %198 = vmatpush.bf16.msra.mxu0 0
    %199 = vmatpush.bf16.msra.mxu0 0
    %200 = vmatpush.bf16.msra.mxu0 0
    %201 = vmatpush.bf16.msra.mxu0 %v193
    %202 = vmatpush.bf16.msra.mxu0 %v181
    %203 = vmatmul.bf16.gmra.mxu0 %v186
    %v204 = vpop.f32.mrf.mxu0
    %v205 = vadd.f32 %v171, %v204
    %v206 = vpop.f32.mrf.mxu0
    %207 = vdwg.mxu0
    %vm208 = vcmask 64512
    %209 = vst.msk [vmem:[#allocation2] sm:$0xff] %vm208, %v205
    // Predicated region
    $region30: #{net_forward.1} parent=1 // pred_check
      _
    $region31: #{net_forward.1} parent=1 // pred_check_branch
      %211 = sbr.rel (0) target = $region33
    $region32: #{net_forward.1} parent=1 // pred_region
      %213 = vsyncadd [#allocation3], 96
      %s214 = sshll.u32 [#allocation2], 4
      %s215 = int_to_ptr.vmem [resolvable:$true] %s214
      %s216 = sshll.u32 %s7, 4
      %s217 = int_to_ptr.hbm [resolvable:$true] %s216
      %222 = dma.vmem_to_hbm [thread:$0]  %s215, 32, %s217, [#allocation3], 32, 32, 2
    $region33: #{net_forward.1} parent=1 // pred_fallthru
      _
    // Predicated region
    $region34: #{net_forward.1} parent=1 // pred_check
      _
    $region35: #{net_forward.1} parent=1 // pred_check_branch
      %224 = sbr.rel (0) target = $region37
    $region36: #{net_forward.1} parent=1 // pred_region
      %226 = dma.done [#allocation3], 128
    $region37: #{net_forward.1} parent=1 // pred_fallthru
      _
    %227 = vsyncpa [#allocation3], 1

</llo_original>
